<compile_context>
chip_gen: v6e
topology: v6e:2x2x1
jax: 0.10.0
libtpu: 0.0.40
codegen_flags: <defaults>
</compile_context>

<pallas_src>
import functools

import jax
import jax.numpy as jnp
from jax.experimental import pallas as pl
from jax.experimental.pallas import tpu as pltpu

_LANE = 128                 # lane width (class dim padded to this only if C >= 128)
_SUBLANE = 8                # sublane width: batch tile must be a multiple of this
_MAX_TB = 2048              # batch-tile cap (v6e's 128 MiB VMEM easily fits this)
_VMEM_BUDGET = 40 << 20     # working-set target: safe inside v7x's 64 MiB physical VMEM
_VMEM_LIMIT = 48 << 20      # scoped-VMEM limit requested from Mosaic


def _round_up(x, m):
    return (x + m - 1) // m * m


def _linear_kernel(x_ref, w_ref, b_ref, o_ref):
    # x_ref: (TB, F), w_ref: (F, C) -> MXU-native (M,K)@(K,N), f32 accumulation;
    # bias add on the VPU.
    acc = jnp.dot(x_ref[...], w_ref[...], preferred_element_type=jnp.float32)
    o_ref[...] = (acc + b_ref[...]).astype(o_ref.dtype)


def prepare_params(weight, bias):
    """One-time (not per-call) param prep.

    * Transposes the PyTorch (C, F) weight to (F, C) for the MXU-native
      orientation inside the kernel.
    * Pads the class dim to a multiple of 128 only when C >= 128 (lane-dense
      output worth it); tiny C stays narrow so output HBM bytes stay small.
      Padded columns are zero (weight and bias), so padded outputs are exact 0.
    """
    C, F = weight.shape
    c_out = _round_up(C, _LANE) if C >= _LANE else C
    w_t = jnp.zeros((F, c_out), weight.dtype).at[:, :C].set(weight.T)
    b_row = jnp.zeros((1, c_out), bias.dtype).at[0, :C].set(bias)
    return w_t, b_row


def _pick_tb(batch, n_features, c_out, itemsize):
    """Batch tile from an explicit VMEM working-set budget."""
    def footprint(tb):
        return itemsize * (2 * tb * n_features          # x, double-buffered
                           + n_features * c_out + c_out  # weight + bias, single-buffered
                           + 2 * tb * c_out)             # out, double-buffered

    tb = _MAX_TB
    while tb > _SUBLANE and footprint(tb) > _VMEM_BUDGET:
        tb //= 2  # stays a multiple of 128 down to 128, then of 8
    # Don't allocate more rows than the (sublane-rounded) batch needs.
    tb = min(tb, _round_up(batch, _SUBLANE))
    # v7x megacore: ensure >= 2 batch tiles when the batch permits, so both
    # TensorCores get work under dimension_semantics=("parallel",).
    if pl.cdiv(batch, tb) == 1 and batch > 2 * _SUBLANE:
        tb = _round_up(pl.cdiv(batch, 2), _SUBLANE)
    return max(tb, _SUBLANE)


@functools.partial(jax.jit, static_argnames=("n_class",))
def classifier_lr_forward(x, w_t, b_row, *, n_class):
    """Forward pass of Classifier_lr.

    x:     (B, F)     float32
    w_t:   (F, C_out) float32   (pre-transposed, optionally lane-padded weight)
    b_row: (1, C_out) float32
    returns (B, n_class) float32, identical to x @ weight.T + bias.
    """
    B, F = x.shape
    c_out = w_t.shape[1]
    itemsize = jnp.dtype(x.dtype).itemsize

    tb = _pick_tb(B, F, c_out, itemsize)
    # Ragged last block: Pallas masks the out-of-bounds rows on writeback, so
    # no jnp.pad copy of x is needed (no cross-row reductions in the kernel).
    grid = (pl.cdiv(B, tb),)

    cost = pl.CostEstimate(
        flops=2 * B * F * c_out,
        transcendentals=0,
        bytes_accessed=(x.size + w_t.size + b_row.size + B * c_out) * itemsize,
    )

    out = pl.pallas_call(
        _linear_kernel,
        out_shape=jax.ShapeDtypeStruct((B, c_out), x.dtype),
        grid_spec=pltpu.PrefetchScalarGridSpec(
            num_scalar_prefetch=0,
            grid=grid,
            in_specs=[
                # x tiled over the batch (double-buffered by Pallas).
                pl.BlockSpec((tb, F), lambda i: (i, 0)),
                # Loop-invariant weight & bias: constant block index, kept
                # resident in VMEM and single-buffered to halve their footprint.
                pl.BlockSpec((F, c_out), lambda i: (0, 0),
                             pipeline_mode=pl.Buffered(1)),
                pl.BlockSpec((1, c_out), lambda i: (0, 0),
                             pipeline_mode=pl.Buffered(1)),
            ],
            out_specs=pl.BlockSpec((tb, c_out), lambda i: (i, 0)),
        ),
        compiler_params=pltpu.CompilerParams(
            # Independent batch tiles -> shard the grid loop across TensorCores.
            dimension_semantics=("parallel",),
            vmem_limit_bytes=_VMEM_LIMIT,
        ),
        cost_estimate=cost,
    )(x, w_t, b_row)

    if c_out != n_class:  # only when the class dim was lane-padded (C >= 128)
        out = out[:, :n_class]
    return out


if __name__ == "__main__":
    # Small shapes consistent with the module: batch=8, n_features=32, n_class=2
    B, F, C = 8, 32, 2

    key = jax.random.PRNGKey(0)
    kx, kw, kb = jax.random.split(key, 3)

    # Deterministic parameter init mimicking nn.Linear default:
    # uniform(-1/sqrt(n_features), 1/sqrt(n_features))
    bound = 1.0 / jnp.sqrt(jnp.float32(F))
    weight = jax.random.uniform(kw, (C, F), jnp.float32, -bound, bound)
    bias = jax.random.uniform(kb, (C,), jnp.float32, -bound, bound)

    x = jax.random.normal(kx, (B, F), jnp.float32)

    # Param prep ONCE (parameter-creation time), then run the forward.
    w_t, b_row = prepare_params(weight, bias)
    y = classifier_lr_forward(x, w_t, b_row, n_class=C)
    y = jax.block_until_ready(y)

    # Reference check in plain JAX (same semantics as torch nn.Linear).
    y_ref = x @ weight.T + bias
    assert y.shape == (B, C)
    assert jnp.allclose(y, y_ref, atol=1e-5, rtol=1e-5)

    print("KERNEL_OK")
</pallas_src>

<mosaic_0001>
module attributes {stable_mosaic.version = 11 : i64} {
  func.func @_linear_kernel(%arg0: i32, %arg1: memref<8x32xf32, #tpu.memory_space<vmem>>, %arg2: memref<32x2xf32, #tpu.memory_space<vmem>>, %arg3: memref<1x2xf32, #tpu.memory_space<vmem>>, %arg4: memref<8x2xf32, #tpu.memory_space<vmem>>) attributes {dimension_semantics = [#tpu.dimension_semantics<parallel>], iteration_bounds = array<i64: 1>, scalar_prefetch = 0 : i64, scratch_operands = 0 : i64, tpu.core_type = #tpu.core_type<tc>, window_params = [{transform_indices = @transform_0, window_bounds = array<i64: 8, 32>}, {pipeline_mode = #tpu.pipeline_mode<synchronous>, transform_indices = @transform_1, window_bounds = array<i64: 32, 2>}, {pipeline_mode = #tpu.pipeline_mode<synchronous>, transform_indices = @transform_2, window_bounds = array<i64: 1, 2>}, {transform_indices = @transform_3, window_bounds = array<i64: 8, 2>}]} {
    %c0 = arith.constant 0 : index
    %c0_0 = arith.constant 0 : index
    %0 = vector.load %arg1[%c0, %c0_0] : memref<8x32xf32, #tpu.memory_space<vmem>>, vector<8x32xf32>
    %c0_1 = arith.constant 0 : index
    %c0_2 = arith.constant 0 : index
    %1 = vector.load %arg2[%c0_1, %c0_2] : memref<32x2xf32, #tpu.memory_space<vmem>>, vector<32x2xf32>
    %cst = arith.constant dense<0.000000e+00> : vector<8x2xf32>
    %2 = tpu.matmul %0, %1, %cst {dimension_numbers = #tpu.dot_dimension_numbers<[1], [0], [0], [1], [0, 0, 1, 1], [], []>} : vector<8x32xf32>, vector<32x2xf32>, vector<8x2xf32> -> vector<8x2xf32>
    %c0_3 = arith.constant 0 : index
    %c0_4 = arith.constant 0 : index
    %3 = vector.load %arg3[%c0_3, %c0_4] : memref<1x2xf32, #tpu.memory_space<vmem>>, vector<1x2xf32>
    %4 = vector.broadcast %3 : vector<1x2xf32> to vector<8x2xf32>
    %5 = arith.addf %2, %4 : vector<8x2xf32>
    %c0_5 = arith.constant 0 : index
    %c0_6 = arith.constant 0 : index
    %6 = vector.load %arg4[%c0_5, %c0_6] : memref<8x2xf32, #tpu.memory_space<vmem>>, vector<8x2xf32>
    tpu.vector_store %arg4[%c0_5, %c0_6], %5 {strides = array<i32>} : memref<8x2xf32, #tpu.memory_space<vmem>>, vector<8x2xf32>,
    return
  }
  func.func @transform_0(%arg0: i32) -> (i32, i32) {
    %c0_i32 = arith.constant 0 : i32
    %c0_i32_0 = arith.constant 0 : i32
    return %arg0, %c0_i32 : i32, i32
  }
  func.func @transform_1(%arg0: i32) -> (i32, i32) {
    %c0_i32 = arith.constant 0 : i32
    %c0_i32_0 = arith.constant 0 : i32
    %c0_i32_1 = arith.constant 0 : i32
    return %c0_i32, %c0_i32_0 : i32, i32
  }
  func.func @transform_2(%arg0: i32) -> (i32, i32) {
    %c0_i32 = arith.constant 0 : i32
    %c0_i32_0 = arith.constant 0 : i32
    %c0_i32_1 = arith.constant 0 : i32
    return %c0_i32, %c0_i32_0 : i32, i32
  }
  func.func @transform_3(%arg0: i32) -> (i32, i32) {
    %c0_i32 = arith.constant 0 : i32
    %c0_i32_0 = arith.constant 0 : i32
    return %arg0, %c0_i32 : i32, i32
  }
}

</mosaic_0001>

<llo_original>
// kernel: classifier_lr_forward.1
$region0: #{classifier_lr_forward.1}
  #allocation0 [shape = 'u32[]', space=smem, size = 0x4, offset = 0x4, fixed_abs, tag = 'smem constant byte address 0x4 - core index']
  #allocation1 [shape = 'u32[144,128]{1,0:T(1,128)}', space=vmem, size = 0x12000, scoped, tag = 'internal scratch']
  %s0 = inlined_call_operand.vmem [shape: f32[8,32], index: 0, kind: input, shape index: {}]
  %s1 = inlined_call_operand.vmem [shape: f32[32,2], index: 1, kind: input, shape index: {}]
  %s2 = inlined_call_operand.vmem [shape: f32[1,2], index: 2, kind: input, shape index: {}]
  %s3 = inlined_call_operand.vmem [shape: f32[8,2], index: 3, kind: output, shape index: {}]
  %s4 = sld [smem:[#allocation0]]
  $region22: #{classifier_lr_forward.1} parent=0
    _
  %s6 = ssub.s32 1, %s4
  %s7 = scalar_select 0, %s6, %s4
  // Predicated region
  $region2: #{classifier_lr_forward.1} parent=0 // pred_check
    _
  $region3: #{classifier_lr_forward.1} parent=0 // pred_check_branch
    %9 = sbr.rel (0) target = $region5
  $region4: #{classifier_lr_forward.1} parent=0 // pred_region
    _
  $region5: #{classifier_lr_forward.1} parent=0 // pred_fallthru
    _
  // Predicated region
  $region6: #{classifier_lr_forward.1} parent=0 // pred_check
    _
  $region7: #{classifier_lr_forward.1} parent=0 // pred_check_branch
    %11 = sbr.rel (0) target = $region9
  $region8: #{classifier_lr_forward.1} parent=0 // pred_region
    _
  $region9: #{classifier_lr_forward.1} parent=0 // pred_fallthru
    _
  // Predicated region
  $region10: #{classifier_lr_forward.1} parent=0 // pred_check
    _
  $region11: #{classifier_lr_forward.1} parent=0 // pred_check_branch
    %13 = sbr.rel (0) target = $region13
  $region12: #{classifier_lr_forward.1} parent=0 // pred_region
    _
  $region13: #{classifier_lr_forward.1} parent=0 // pred_fallthru
    _
  %v14 = vld [vmem:[%s0] sm:$0xff]
  %v15 = vld [vmem:[%s1] sm:$0xff]
  %v16 = vld [vmem:[%s1 + $0x8] sm:$0xff]
  %v17 = vld [vmem:[%s1 + $0x10] sm:$0xff]
  %v18 = vld [vmem:[%s1 + $0x18] sm:$0xff]
  %v19 = vld [vmem:[%s2] sm:$0x1]
  %v21 = vlaneseq
  %v22 = vshrl.u32 %v21, 7
  %v23 = vsub.s32 0, %v22
  %v24 = vrot.slane %v19, %v23
  %vm26 = vcmask 261120
  %v28 = vsel %vm26, %v14, 0
  %30 = vmatprep.subr.mxu0 0.0
  %31 = vmatpush1.msra.mxu0 0.0
  %32 = vmatprep.subr.mxu0 0.0
  %33 = vmatpush1.msra.mxu0 0.0
  %34 = vmatprep.subr.mxu0 0.0
  %35 = vmatpush1.msra.mxu0 0.0
  %36 = vmatprep.subr.mxu0 0.0
  %37 = vmatpush1.msra.mxu0 0.0
  %38 = vmatprep.subr.mxu0 0.0
  %39 = vmatpush1.msra.mxu0 0.0
  %40 = vmatprep.subr.mxu0 0.0
  %41 = vmatpush1.msra.mxu0 0.0
  %42 = vmatprep.subr.mxu0 0.0
  %43 = vmatpush1.msra.mxu0 0.0
  %44 = vmatprep.subr.mxu0 0.0
  %45 = vmatpush1.msra.mxu0 0.0
  %46 = vmatprep.subr.mxu0 0.0
  %47 = vmatpush1.msra.mxu0 0.0
  %48 = vmatprep.subr.mxu0 0.0
  %49 = vmatpush1.msra.mxu0 0.0
  %50 = vmatprep.subr.mxu0 0.0
  %51 = vmatpush1.msra.mxu0 0.0
  %52 = vmatprep.subr.mxu0 0.0
  %53 = vmatpush1.msra.mxu0 0.0
  %54 = vmatprep.subr.mxu0 0.0
  %55 = vmatpush1.msra.mxu0 %v18
  %56 = vmatprep.subr.mxu0 0.0
  %57 = vmatpush1.msra.mxu0 %v17
  %58 = vmatprep.subr.mxu0 0.0
  %59 = vmatpush1.msra.mxu0 %v16
  %60 = vmatprep.subr.mxu0 0.0
  %61 = vmatpush1.msra.mxu0 %v15
  %62 = vmatprep.subr.mxu0 0.0
  %63 = vmatpush2.msra.mxu0 0.0
  %64 = vmatprep.subr.mxu0 0.0
  %65 = vmatpush2.msra.mxu0 0.0
  %66 = vmatprep.subr.mxu0 0.0
  %67 = vmatpush2.msra.mxu0 0.0
  %68 = vmatprep.subr.mxu0 0.0
  %69 = vmatpush2.msra.mxu0 0.0
  %70 = vmatprep.subr.mxu0 0.0
  %71 = vmatpush2.msra.mxu0 0.0
  %72 = vmatprep.subr.mxu0 0.0
  %73 = vmatpush2.msra.mxu0 0.0
  %74 = vmatprep.subr.mxu0 0.0
  %75 = vmatpush2.msra.mxu0 0.0
  %76 = vmatprep.subr.mxu0 0.0
  %77 = vmatpush2.msra.mxu0 0.0
  %78 = vmatprep.subr.mxu0 0.0
  %79 = vmatpush2.msra.mxu0 0.0
  %80 = vmatprep.subr.mxu0 0.0
  %81 = vmatpush2.msra.mxu0 0.0
  %82 = vmatprep.subr.mxu0 0.0
  %83 = vmatpush2.msra.mxu0 0.0
  %84 = vmatprep.subr.mxu0 0.0
  %85 = vmatpush2.msra.mxu0 0.0
  %86 = vmatprep.subr.mxu0 0.0
  %87 = vmatpush2.msra.mxu0 0.0
  %88 = vmatprep.subr.mxu0 0.0
  %89 = vmatpush2.msra.mxu0 0.0
  %90 = vmatprep.subr.mxu0 0.0
  %91 = vmatpush2.msra.mxu0 0.0
  %92 = vmatprep.subr.mxu0 0.0
  %93 = vmatpush2.msra.mxu0 0.0
  %94 = vmatprep.mubr.f32.mxu0 0.0
  %95 = vmatmul.mubr.f32.gmra.mxu0 %v28
  %v96 = vpop.f32.mrf.mxu0
  %v97 = vadd.f32 %v24, %v96
  %v98 = vpop.f32.mrf.mxu0
  %99 = vdwg.mxu0
  %vm100 = vcmask 15360
  %101 = vst.msk [vmem:[%s3] sm:$0xff] %vm100, %v97
  // Predicated region
  $region14: #{classifier_lr_forward.1} parent=0 // pred_check
    _
  $region15: #{classifier_lr_forward.1} parent=0 // pred_check_branch
    %103 = sbr.rel (0) target = $region17
  $region16: #{classifier_lr_forward.1} parent=0 // pred_region
    _
  $region17: #{classifier_lr_forward.1} parent=0 // pred_fallthru
    _
  // Predicated region
  $region18: #{classifier_lr_forward.1} parent=0 // pred_check
    _
  $region19: #{classifier_lr_forward.1} parent=0 // pred_check_branch
    %105 = sbr.rel (0) target = $region21
  $region20: #{classifier_lr_forward.1} parent=0 // pred_region
    _
  $region21: #{classifier_lr_forward.1} parent=0 // pred_fallthru
    _

</llo_original>
